<compile_context>
chip_gen: v7x
topology: tpu7x:2x2x1
jax: 0.10.0
libtpu: 0.0.40
codegen_flags: <defaults>
</compile_context>

<pallas_src>
import functools

import jax
import jax.numpy as jnp
from jax.experimental import pallas as pl
from jax.experimental.pallas import tpu as pltpu

# VMEM budget for the double-buffered output block (the dominant buffer):
# 2 * tm * d_model * itemsize <= 16 MiB.
_OUT_VMEM_BUDGET_BYTES = 16 * 1024 * 1024
# Scoped-VMEM limit requested from Mosaic: above v5e's 16 MiB scoped default,
# equal to the v6e/v7x defaults, and ~2x the kernel's actual peak usage.
_VMEM_LIMIT_BYTES = 32 * 1024 * 1024


def _round_up(x, m):
    return (x + m - 1) // m * m


def _posemb3d_kernel(c_ref, w_ref, o_ref):
    """c_ref: (tm, 3), w_ref: (3, H), o_ref: (tm, 2*H)."""
    H = w_ref.shape[1]
    c = c_ref[...]                      # (tm, 3) f32
    w = w_ref[...]                      # (3, H)  f32
    # K == 3 is far below the MXU tile size -> do the contraction as 3
    # broadcast multiply-adds on the VPU (exact f32).
    e = (c[:, 0:1] * w[0:1, :]
         + c[:, 1:2] * w[1:2, :]
         + c[:, 2:3] * w[2:3, :])       # (tm, H) f32
    # Direct slice stores: no concatenated (tm, 2H) temporary, half the live
    # vreg state, and lane-dense (unmasked vst) whenever H % 128 == 0.
    o_ref[:, :H] = jnp.cos(e).astype(o_ref.dtype)
    o_ref[:, H:] = jnp.sin(e).astype(o_ref.dtype)


@functools.partial(jax.jit, static_argnames=("tm", "out_dtype"))
def positional_embedding_3d(c, w_t, *, tm=2048, out_dtype=jnp.float32):
    """PostionalEmbedding3D.forward (self.mlp is None for the default config).

    c:   (B, L, 3) float32 coordinates.
    w_t: (3, H) = nn.Linear(3, d_model//2, bias=False).weight.T
    Returns (B, L, 2*H) in `out_dtype` (float32 by default; pass bfloat16 on
    store-bandwidth-bound v5e if the consumer accepts it).
    """
    B, L, three = c.shape
    assert three == 3, "coordinates must be 3D"
    H = w_t.shape[1]
    d_model = 2 * H
    N = B * L
    c_flat = c.reshape(N, 3)

    # ---- row-tile selection -------------------------------------------------
    # Biggest tile that (a) keeps the double-buffered output block inside the
    # VMEM budget, (b) is a multiple of 8 (sublane), (c) is not larger than
    # the (sublane-rounded) row count.
    row_bytes = d_model * jnp.dtype(out_dtype).itemsize
    tm_cap = max(8, (_OUT_VMEM_BUDGET_BYTES // (2 * row_bytes)) // 8 * 8)
    tm_eff = max(8, min(_round_up(tm, 8), tm_cap, _round_up(N, 8)))
    # Give the megacore "parallel" split at least two grid steps to shard.
    if pl.cdiv(N, tm_eff) < 2 and N >= 16:
        tm_eff = max(8, _round_up(pl.cdiv(N, 2), 8))
    grid = (pl.cdiv(N, tm_eff),)        # ragged last block handled by Pallas

    out_flat = pl.pallas_call(
        _posemb3d_kernel,
        out_shape=jax.ShapeDtypeStruct((N, d_model), out_dtype),
        grid_spec=pltpu.PrefetchScalarGridSpec(
            num_scalar_prefetch=0,
            grid=grid,
            in_specs=[
                pl.BlockSpec((tm_eff, 3), lambda i: (i, 0)),
                # Full weight, same block every step (DMA'd once, then reused).
                pl.BlockSpec((3, H), lambda i: (0, 0)),
            ],
            out_specs=pl.BlockSpec((tm_eff, d_model), lambda i: (i, 0)),
        ),
        compiler_params=pltpu.CompilerParams(
            dimension_semantics=("parallel",),
            vmem_limit_bytes=_VMEM_LIMIT_BYTES),
    )(c_flat, w_t)

    return out_flat.reshape(B, L, d_model)


def _reference(c, w_t):
    e = jnp.einsum("blk,kh->blh", c, w_t)
    return jnp.concatenate([jnp.cos(e), jnp.sin(e)], axis=-1)


if __name__ == "__main__":
    # Small shapes consistent with the module: batch=2, seq=8, d_model=32.
    B, L, d_model = 2, 8, 32
    H = d_model // 2

    key = jax.random.PRNGKey(0)
    k_w, k_c = jax.random.split(key)

    # init_embedding_layers does torch.nn.init.uniform_(weight, 0.0, 1.0);
    # nn.Linear(3, H, bias=False).weight has shape (H, 3).
    weight = jax.random.uniform(k_w, (H, 3), dtype=jnp.float32,
                                minval=0.0, maxval=1.0)
    w_t = weight.T                                   # (3, H)

    # 3D coordinates input.
    c = jax.random.normal(k_c, (B, L, 3), dtype=jnp.float32)

    # TODO(synk): MLP3 is not applied — with the module's default
    # learnable_embedding_type ('learnable_weights_and_MLP3') no branch of
    # init_embedding_layers matches, so self.mlp is None and forward is just
    # cos/sin of the linear projection.
    out = positional_embedding_3d(c, w_t)
    jax.block_until_ready(out)

    ref = _reference(c, w_t)
    assert out.shape == (B, L, d_model)
    assert out.dtype == jnp.float32
    assert jnp.allclose(out, ref, atol=1e-5, rtol=1e-5), "mismatch vs reference"

    print("KERNEL_OK")
</pallas_src>

<mosaic_0001>
module attributes {stable_mosaic.version = 11 : i64} {
  func.func @_posemb3d_kernel(%arg0: i32, %arg1: memref<8x3xf32, #tpu.memory_space<vmem>>, %arg2: memref<3x16xf32, #tpu.memory_space<vmem>>, %arg3: memref<8x32xf32, #tpu.memory_space<vmem>>) attributes {dimension_semantics = [#tpu.dimension_semantics<parallel>], iteration_bounds = array<i64: 2>, scalar_prefetch = 0 : i64, scratch_operands = 0 : i64, tpu.core_type = #tpu.core_type<tc>, window_params = [{transform_indices = @transform_0, window_bounds = array<i64: 8, 3>}, {pipeline_mode = #tpu.pipeline_mode<synchronous>, transform_indices = @transform_1, window_bounds = array<i64: 3, 16>}, {transform_indices = @transform_2, window_bounds = array<i64: 8, 32>}]} {
    %c0 = arith.constant 0 : index
    %c0_0 = arith.constant 0 : index
    %0 = vector.load %arg1[%c0, %c0_0] : memref<8x3xf32, #tpu.memory_space<vmem>>, vector<8x3xf32>
    %c0_1 = arith.constant 0 : index
    %c0_2 = arith.constant 0 : index
    %1 = vector.load %arg2[%c0_1, %c0_2] : memref<3x16xf32, #tpu.memory_space<vmem>>, vector<3x16xf32>
    %2 = vector.extract_strided_slice %0 {offsets = [0, 0], sizes = [8, 1], strides = [1, 1]} : vector<8x3xf32> to vector<8x1xf32>
    %3 = vector.extract_strided_slice %1 {offsets = [0, 0], sizes = [1, 16], strides = [1, 1]} : vector<3x16xf32> to vector<1x16xf32>
    %4 = vector.broadcast %2 : vector<8x1xf32> to vector<8x16xf32>
    %5 = vector.broadcast %3 : vector<1x16xf32> to vector<8x16xf32>
    %6 = arith.mulf %4, %5 : vector<8x16xf32>
    %7 = vector.extract_strided_slice %0 {offsets = [0, 1], sizes = [8, 1], strides = [1, 1]} : vector<8x3xf32> to vector<8x1xf32>
    %8 = vector.extract_strided_slice %1 {offsets = [1, 0], sizes = [1, 16], strides = [1, 1]} : vector<3x16xf32> to vector<1x16xf32>
    %9 = vector.broadcast %7 : vector<8x1xf32> to vector<8x16xf32>
    %10 = vector.broadcast %8 : vector<1x16xf32> to vector<8x16xf32>
    %11 = arith.mulf %9, %10 : vector<8x16xf32>
    %12 = arith.addf %6, %11 : vector<8x16xf32>
    %13 = vector.extract_strided_slice %0 {offsets = [0, 2], sizes = [8, 1], strides = [1, 1]} : vector<8x3xf32> to vector<8x1xf32>
    %14 = vector.extract_strided_slice %1 {offsets = [2, 0], sizes = [1, 16], strides = [1, 1]} : vector<3x16xf32> to vector<1x16xf32>
    %15 = vector.broadcast %13 : vector<8x1xf32> to vector<8x16xf32>
    %16 = vector.broadcast %14 : vector<1x16xf32> to vector<8x16xf32>
    %17 = arith.mulf %15, %16 : vector<8x16xf32>
    %18 = arith.addf %12, %17 : vector<8x16xf32>
    %19 = math.cos %18 : vector<8x16xf32>
    %c0_3 = arith.constant 0 : index
    %c0_4 = arith.constant 0 : index
    %20 = vector.load %arg3[%c0_3, %c0_4] : memref<8x32xf32, #tpu.memory_space<vmem>>, vector<8x16xf32>
    tpu.vector_store %arg3[%c0_3, %c0_4], %19 {strides = array<i32>} : memref<8x32xf32, #tpu.memory_space<vmem>>, vector<8x16xf32>,
    %21 = math.sin %18 : vector<8x16xf32>
    %c0_5 = arith.constant 0 : index
    %c16 = arith.constant 16 : index
    %22 = vector.load %arg3[%c0_5, %c16] : memref<8x32xf32, #tpu.memory_space<vmem>>, vector<8x16xf32>
    tpu.vector_store %arg3[%c0_5, %c16], %21 {strides = array<i32>} : memref<8x32xf32, #tpu.memory_space<vmem>>, vector<8x16xf32>,
    return
  }
  func.func @transform_0(%arg0: i32) -> (i32, i32) {
    %c0_i32 = arith.constant 0 : i32
    %c0_i32_0 = arith.constant 0 : i32
    return %arg0, %c0_i32 : i32, i32
  }
  func.func @transform_1(%arg0: i32) -> (i32, i32) {
    %c0_i32 = arith.constant 0 : i32
    %c0_i32_0 = arith.constant 0 : i32
    %c0_i32_1 = arith.constant 0 : i32
    return %c0_i32, %c0_i32_0 : i32, i32
  }
  func.func @transform_2(%arg0: i32) -> (i32, i32) {
    %c0_i32 = arith.constant 0 : i32
    %c0_i32_0 = arith.constant 0 : i32
    return %arg0, %c0_i32 : i32, i32
  }
}

</mosaic_0001>

<llo_original>
// kernel: positional_embedding_3d.1
$region0: #{positional_embedding_3d.1}
  #allocation0 [shape = 'u32[]', space=smem, size = 0x4, offset = 0x4, fixed_abs, tag = 'smem constant byte address 0x4 - core index']
  #allocation1 [shape = 'u32[144,128]{1,0:T(1,128)}', space=vmem, size = 0x12000, scoped, tag = 'internal scratch']
  %s0 = inlined_call_operand.vmem [shape: f32[16,3], index: 0, kind: input, shape index: {}]
  %s1 = inlined_call_operand.vmem [shape: f32[3,16], index: 1, kind: input, shape index: {}]
  %s2 = inlined_call_operand.hbm [shape: f32[16,32], index: 2, kind: output, shape index: {}]
  %s3 = sld [smem:[#allocation0]]
  $region41: #{positional_embedding_3d.1} parent=0
    _
  %s5 = ssub.s32 1, %s3
  %s6 = scalar_select 0, %s5, %s3
  $region1: #{positional_embedding_3d.1} parent=0
    #allocation2 [shape = 'u8[8192]{0}', space=vmem, size = 0x2000, scoped, tag = 'output window, operand 0']
    #allocation3 [shape = 's32[2]{0}', space=sflag, size = 0x8, scoped, tag = 'scoped memory for positional_embedding_3d.1']
    %7 = vsyncpa [#allocation3], 0
    %s8 = scalar_lea.sflag [#allocation3], 1
    %9 = vsyncpa %s8, 0
    loop: start=0, step=1, limit=4
    $region2: #{positional_embedding_3d.1} parent=1 // loop_pre_header
      _
    $region3: #{positional_embedding_3d.1} parent=1 // loop_header
      %s11 = sphi 0, %s15
      %p12 = scmp.ge.s32.totalorder %s11, 4
      %s21 = sphi 0, %s23
      %s24 = sphi 0, %s21
      %s25 = sphi 0, %s24
      %s41 = sphi 0, %s25
      %s45 = sphi 0, %s45
      %s47 = sphi 0, %s45
      %s48 = sphi 0, %s47
      %s62 = sphi 0, %s48
      %s68 = sphi 0, %s70
      %s71 = sphi 0, %s68
      %s72 = sphi 0, %s71
      %s88 = sphi 0, %s72
    $region4: #{positional_embedding_3d.1} parent=1 // loop_header_branch
      %14 = sbr.rel (%p12) target = $region8
    $region5: #{positional_embedding_3d.1} parent=1 // loop_body
      %s16 = ssub.s32 %s11, 1
      %s17 = ssub.s32 %s11, 2
      %s18 = sadd.s32 %s11, 1
      %s19 = ssub.s32 %s11, %s18
      %p20 = scmp.eq.s32.totalorder %s19, 0
      %s22 = sadd.s32 %s21, 1
      %s23 = scalar_select %p20, %s21, %s22
      %p26 = pneg %p20
      %p27 = scmp.eq.s32.totalorder %s11, 1
      %p28 = por %p26, %p27
      %p29 = scmp.ne.s32.totalorder %s21, %s24
      %p30 = scmp.eq.s32.totalorder %s11, 0
      %p31 = por %p29, %p30
      %p32 = scmp.ne.s32.totalorder %s21, %s24
      %p33 = scmp.eq.s32.totalorder %s16, 1
      %p34 = por %p32, %p33
      %p35 = scmp.ne.s32.totalorder %s24, %s25
      %p36 = scmp.eq.s32.totalorder %s16, 0
      %p37 = por %p35, %p36
      %p38 = scmp.ne.s32.totalorder %s24, %s25
      %p39 = scmp.eq.s32.totalorder %s17, 1
      %p40 = por %p38, %p39
      %p42 = scmp.ne.s32.totalorder %s25, %s41
      %p43 = scmp.eq.s32.totalorder %s17, 0
      %p44 = por %p42, %p43
      %s46 = sadd.s32 %s45, 1
      %p49 = scmp.eq.s32.totalorder %s11, 1
      %p50 = scmp.ne.s32.totalorder %s45, %s47
      %p51 = scmp.eq.s32.totalorder %s11, 0
      %p52 = por %p50, %p51
      %p53 = scmp.ne.s32.totalorder %s45, %s47
      %p54 = scmp.eq.s32.totalorder %s16, 1
      %p55 = por %p53, %p54
      %p56 = scmp.ne.s32.totalorder %s47, %s48
      %p57 = scmp.eq.s32.totalorder %s16, 0
      %p58 = por %p56, %p57
      %p59 = scmp.ne.s32.totalorder %s47, %s48
      %p60 = scmp.eq.s32.totalorder %s17, 1
      %p61 = por %p59, %p60
      %p63 = scmp.ne.s32.totalorder %s48, %s62
      %p64 = scmp.eq.s32.totalorder %s17, 0
      %p65 = por %p63, %p64
      %s66 = ssub.s32 %s11, %s18
      %p67 = scmp.eq.s32.totalorder %s66, 0
      %s69 = sadd.s32 %s68, 1
      %s70 = scalar_select %p67, %s68, %s69
      %p73 = pneg %p67
      %p74 = scmp.eq.s32.totalorder %s11, 1
      %p75 = por %p73, %p74
      %p76 = scmp.ne.s32.totalorder %s68, %s71
      %p77 = scmp.eq.s32.totalorder %s11, 0
      %p78 = por %p76, %p77
      %p79 = scmp.ne.s32.totalorder %s68, %s71
      %p80 = scmp.eq.s32.totalorder %s16, 1
      %p81 = por %p79, %p80
      %p82 = scmp.ne.s32.totalorder %s71, %s72
      %p83 = scmp.eq.s32.totalorder %s16, 0
      %p84 = por %p82, %p83
      %p85 = scmp.ne.s32.totalorder %s71, %s72
      %p86 = scmp.eq.s32.totalorder %s17, 1
      %p87 = por %p85, %p86
      %p89 = scmp.ne.s32.totalorder %s72, %s88
      %p90 = scmp.eq.s32.totalorder %s17, 0
      %p91 = por %p89, %p90
      %p92 = scmp.le.s32.totalorder 1, %s11
      %p93 = scmp.lt.s32.totalorder %s11, 3
      %p94 = pnand %p92, %p93
      %p95 = pneg %p94
      // Predicated region
      $region9: #{positional_embedding_3d.1} parent=5 // pred_check
        _
      $region10: #{positional_embedding_3d.1} parent=5 // pred_check_branch
        %97 = sbr.rel (%p94) target = $region12
      $region11: #{positional_embedding_3d.1} parent=5 // pred_region
        %s98 = ssub.s32 %s11, 1
        // Predicated region
        $region13: #{positional_embedding_3d.1} parent=11 // pred_check
          %p99 = pneg %p58
        $region14: #{positional_embedding_3d.1} parent=11 // pred_check_branch
          %101 = sbr.rel (%p99) target = $region16
        $region15: #{positional_embedding_3d.1} parent=11 // pred_region
          _
        $region16: #{positional_embedding_3d.1} parent=11 // pred_fallthru
          _
      $region12: #{positional_embedding_3d.1} parent=5 // pred_fallthru
        _
      %p102 = scmp.lt.s32.totalorder %s11, 2
      // Predicated region
      $region17: #{positional_embedding_3d.1} parent=5 // pred_check
        %p103 = pneg %p102
      $region18: #{positional_embedding_3d.1} parent=5 // pred_check_branch
        %105 = sbr.rel (%p103) target = $region20
      $region19: #{positional_embedding_3d.1} parent=5 // pred_region
        // Predicated region
        $region21: #{positional_embedding_3d.1} parent=19 // pred_check
          %p106 = pneg %p31
        $region22: #{positional_embedding_3d.1} parent=19 // pred_check_branch
          %108 = sbr.rel (%p106) target = $region24
        $region23: #{positional_embedding_3d.1} parent=19 // pred_region
          %p109 = scmp.lt.s32.totalorder %s11, 1
          %s110 = scalar_select %p109, %s11, 1
          %s111 = smul.addr %s110, 8
          %s112 = scalar_lea.vmem %s0, %s111
        $region24: #{positional_embedding_3d.1} parent=19 // pred_fallthru
          _
      $region20: #{positional_embedding_3d.1} parent=5 // pred_fallthru
        _
      %p113 = scmp.le.s32.totalorder 1, %s11
      %p114 = scmp.lt.s32.totalorder %s11, 3
      %p115 = pnand %p113, %p114
      %p116 = pneg %p115
      // Predicated region
      $region25: #{positional_embedding_3d.1} parent=5 // pred_check
        _
      $region26: #{positional_embedding_3d.1} parent=5 // pred_check_branch
        %118 = sbr.rel (%p115) target = $region28
      $region27: #{positional_embedding_3d.1} parent=5 // pred_region
        %s119 = ssub.s32 %s11, 1
        %p120 = scmp.lt.s32.totalorder %s16, 1
        %s121 = scalar_select %p120, %s16, 1
        %s122 = smul.addr %s121, 8
        %s123 = scalar_lea.vmem %s0, %s122
        %p124 = pneg %p37
        %p125 = pneg %p34
        %p126 = pneg %p58
        %p127 = pneg %p55
        %p128 = pneg %p84
        %p129 = pneg %p81
        %s130 = sand.u32 %s71, 1
        %s131 = scalar_lea.sflag [#allocation3], %s130
        %s132 = sand.u32 %s71, 1
        %s133 = smul.addr %s132, 8
        %s134 = scalar_lea.vmem [#allocation2], %s133
        %p135 = scmp.lt.s32.totalorder %s16, 1
        %s136 = scalar_select %p135, %s16, 1
        %s137 = smul.addr %s136, 8
        %s138 = scalar_lea.vmem %s0, %s137
        %v139 = vld [vmem:[%s138] sm:$0xff]
        %v140 = vld [vmem:[%s1] sm:$0x7]
        %142 = vset.pattern.permute.xlu0 0
        %143 = vperm.xlu0 %142, %v139
        %v144 = vpop.permute.xlu0 %143
        %v146 = vlaneseq
        %v147 = vshrl.u32 %v146, 7
        %v148 = vsub.s32 0, %v147
        %v149 = vrot.slane %v140, %v148
        %v150 = vmul.f32 %v144, %v149
        %151 = vset.pattern.permute.xlu0 1
        %152 = vperm.xlu0 %151, %v139
        %v153 = vpop.permute.xlu0 %152
        %v155 = vlaneseq
        %v156 = vshrl.u32 %v155, 7
        %v157 = vsub.s32 1, %v156
        %v158 = vrot.slane %v140, %v157
        %v159 = vmul.f32 %v153, %v158
        %v160 = vadd.f32 %v150, %v159
        %161 = vset.pattern.permute.xlu0 2
        %162 = vperm.xlu0 %161, %v139
        %v163 = vpop.permute.xlu0 %162
        %v165 = vlaneseq
        %v166 = vshrl.u32 %v165, 7
        %v167 = vsub.s32 2, %v166
        %v168 = vrot.slane %v140, %v167
        %v169 = vmul.f32 %v163, %v168
        %v170 = vadd.f32 %v160, %v169
        %v171 = vand.u32 2147483647, %v170
        %vm172 = vcmp.le.f32.partialorder %v171, 0.7853982
        %vm173 = vcmp.lt.s32.totalorder %v170, 0
        %v174 = vand.u32 %v170, 2139095040
        %v175 = vshrl.u32 %v174, 23
        %v176 = vsub.s32 %v175, 127
        %v177 = vand.u32 2147483647, %v170
        %v178 = vand.u32 %v177, 8388607
        %v179 = vor.u32 %v178, 8388608
        %v180 = vsub.s32 0, %v179
        %v181 = vadd.s32 %v176, 1
        %vm182 = vcmp.gt.s32.totalorder %v181, 0
        %v183 = vsel %vm182, %v181, 0
        %v184 = vshrl.u32 %v183, 5
        %v185 = vand.u32 %v183, 31
        %v186 = vsub.s32 32, %v185
        %v187 = vshrl.u32 683565275, %v186
        %v188 = vshll.u32 683565275, %v185
        %v189 = vshrl.u32 2475754826, %v186
        %v190 = vor.u32 %v188, %v189
        %v191 = vshll.u32 2475754826, %v185
        %v192 = vshrl.u32 2131351028, %v186
        %v193 = vor.u32 %v191, %v192
        %v194 = vshll.u32 2131351028, %v185
        %v195 = vshrl.u32 2102212464, %v186
        %v196 = vor.u32 %v194, %v195
        %v197 = vshll.u32 2102212464, %v185
        %v198 = vshrl.u32 920167782, %v186
        %v199 = vor.u32 %v197, %v198
        %v200 = vshll.u32 920167782, %v185
        %v201 = vshrl.u32 1326507024, %v186
        %v202 = vor.u32 %v200, %v201
        %vm203 = vcmp.lt.s32.totalorder %v184, 1
        %vm204 = vcmp.lt.s32.totalorder %v184, 2
        %vm205 = vcmp.lt.s32.totalorder %v184, 3
        %vm206 = vcmp.lt.s32.totalorder %v184, 4
        %v207 = vsel %vm203, %v187, %v190
        %v208 = vsel %vm206, %v196, 2102212464
        %v209 = vsel %vm205, %v193, %v208
        %v210 = vsel %vm204, %v207, %v209
        %v211 = vsel %vm203, %v190, %v193
        %v212 = vsel %vm206, %v199, 920167782
        %v213 = vsel %vm205, %v196, %v212
        %v214 = vsel %vm204, %v211, %v213
        %v215 = vsel %vm203, %v193, %v196
        %v216 = vsel %vm206, %v202, 1326507024
        %v217 = vsel %vm205, %v199, %v216
        %v218 = vsel %vm204, %v215, %v217
        %v219 = vshll.u32 %v179, 8
        %v220 = vmul.u32.u64.compose %v219, %v218
        %v221 = vextract.low.u32 %v220
        %v222 = vextract.high.u32 %v220
        %v223 = vmul.u32.u64.compose %v219, %v214
        %v224 = vextract.low.u32 %v223
        %v225 = vextract.high.u32 %v223
        %v226 = vmul.u32 %v219, %v210
        %v227 = vadd.s32 %v222, %v224
        %vm228 = vc.u32 %v222, %v224
        %v229 = vadd.s32 %v225, 1
        %v230 = vsel %vm228, %v229, %v225
        %v231 = vadd.s32 %v226, %v230
        %v232 = vadd.s32 %v231, 536870912
        %v233 = vshrl.u32 %v232, 30
        %v234 = vshll.u32 %v233, 30
        %v235 = vsub.s32 %v231, %v234
        %vm236 = vcmp.lt.s32.totalorder %v235, 0
        %v237 = vsub.s32 0, %v235
        %v238 = vsel %vm236, %v237, %v235
        %v239 = vclz %v238
        %v240 = vsub.s32 %v239, 2
        %vm241 = vcmp.gt.s32.totalorder 0, %v240
        %v242 = vsel %vm241, 0, %v240
        %v243 = vsub.s32 32, %v242
        %v244 = vshll.u32 %v235, %v242
        %v245 = vshrl.u32 %v227, %v243
        %v246 = vor.u32 %v244, %v245
        %v247 = vsub.s32 4294967266, %v242
        %v248 = vadd.s32 %v247, 127
        %v249 = vshll.u32 %v248, 23
        %v250 = vor.u32 4788187, %v249
        %v251 = vand.u32 2147483647, %v250
        %v253 = vcvt.s32.f32 %v246
        %v254 = vmul.f32 %v253, %v251
        %v255 = vxor.u32 %v254, 2147483648
        %v256 = vsel %vm173, %v255, %v254
        %v257 = vsub.s32 4, %v233
        %v258 = vsel %vm173, %v257, %v233
        %v259 = vsel %vm172, %v170, %v256
        %v260 = vsel %vm172, 0, %v258
        %v261 = vcosq.f32.pop %v259
        %v262 = vsinq.f32.pop %v259
        %vm263 = vweird.f32 %v170
        %v264 = vand.u32 %v260, 3
        %vm265 = vcmp.lt.s32.totalorder %v264, 2
        %vm266 = vcmp.eq.s32.totalorder %v264, 0
        %v267 = vxor.u32 %v262, 2147483648
        %v268 = vsel %vm266, %v261, %v267
        %vm269 = vcmp.eq.s32.totalorder %v264, 2
        %v270 = vxor.u32 %v261, 2147483648
        %v271 = vsel %vm269, %v270, %v262
        %v272 = vsel %vm265, %v268, %v271
        %v273 = vsel %vm263, nan, %v272
        %vm274 = vcmask 130048
        %275 = vst.msk [vmem:[%s134] sm:$0xff] %vm274, %v273
        %v276 = vand.u32 2147483647, %v170
        %vm277 = vcmp.le.f32.partialorder %v276, 0.7853982
        %vm278 = vcmp.lt.s32.totalorder %v170, 0
        %v279 = vand.u32 %v170, 2139095040
        %v280 = vshrl.u32 %v279, 23
        %v281 = vsub.s32 %v280, 127
        %v282 = vand.u32 2147483647, %v170
        %v283 = vand.u32 %v282, 8388607
        %v284 = vor.u32 %v283, 8388608
        %v285 = vsub.s32 0, %v284
        %v286 = vadd.s32 %v281, 1
        %vm287 = vcmp.gt.s32.totalorder %v286, 0
        %v288 = vsel %vm287, %v286, 0
        %v289 = vshrl.u32 %v288, 5
        %v290 = vand.u32 %v288, 31
        %v291 = vsub.s32 32, %v290
        %v292 = vshrl.u32 683565275, %v291
        %v293 = vshll.u32 683565275, %v290
        %v294 = vshrl.u32 2475754826, %v291
        %v295 = vor.u32 %v293, %v294
        %v296 = vshll.u32 2475754826, %v290
        %v297 = vshrl.u32 2131351028, %v291
        %v298 = vor.u32 %v296, %v297
        %v299 = vshll.u32 2131351028, %v290
        %v300 = vshrl.u32 2102212464, %v291
        %v301 = vor.u32 %v299, %v300
        %v302 = vshll.u32 2102212464, %v290
        %v303 = vshrl.u32 920167782, %v291
        %v304 = vor.u32 %v302, %v303
        %v305 = vshll.u32 920167782, %v290
        %v306 = vshrl.u32 1326507024, %v291
        %v307 = vor.u32 %v305, %v306
        %vm308 = vcmp.lt.s32.totalorder %v289, 1
        %vm309 = vcmp.lt.s32.totalorder %v289, 2
        %vm310 = vcmp.lt.s32.totalorder %v289, 3
        %vm311 = vcmp.lt.s32.totalorder %v289, 4
        %v312 = vsel %vm308, %v292, %v295
        %v313 = vsel %vm311, %v301, 2102212464
        %v314 = vsel %vm310, %v298, %v313
        %v315 = vsel %vm309, %v312, %v314
        %v316 = vsel %vm308, %v295, %v298
        %v317 = vsel %vm311, %v304, 920167782
        %v318 = vsel %vm310, %v301, %v317
        %v319 = vsel %vm309, %v316, %v318
        %v320 = vsel %vm308, %v298, %v301
        %v321 = vsel %vm311, %v307, 1326507024
        %v322 = vsel %vm310, %v304, %v321
        %v323 = vsel %vm309, %v320, %v322
        %v324 = vshll.u32 %v284, 8
        %v325 = vmul.u32.u64.compose %v324, %v323
        %v326 = vextract.low.u32 %v325
        %v327 = vextract.high.u32 %v325
        %v328 = vmul.u32.u64.compose %v324, %v319
        %v329 = vextract.low.u32 %v328
        %v330 = vextract.high.u32 %v328
        %v331 = vmul.u32 %v324, %v315
        %v332 = vadd.s32 %v327, %v329
        %vm333 = vc.u32 %v327, %v329
        %v334 = vadd.s32 %v330, 1
        %v335 = vsel %vm333, %v334, %v330
        %v336 = vadd.s32 %v331, %v335
        %v337 = vadd.s32 %v336, 536870912
        %v338 = vshrl.u32 %v337, 30
        %v339 = vshll.u32 %v338, 30
        %v340 = vsub.s32 %v336, %v339
        %vm341 = vcmp.lt.s32.totalorder %v340, 0
        %v342 = vsub.s32 0, %v340
        %v343 = vsel %vm341, %v342, %v340
        %v344 = vclz %v343
        %v345 = vsub.s32 %v344, 2
        %vm346 = vcmp.gt.s32.totalorder 0, %v345
        %v347 = vsel %vm346, 0, %v345
        %v348 = vsub.s32 32, %v347
        %v349 = vshll.u32 %v340, %v347
        %v350 = vshrl.u32 %v332, %v348
        %v351 = vor.u32 %v349, %v350
        %v352 = vsub.s32 4294967266, %v347
        %v353 = vadd.s32 %v352, 127
        %v354 = vshll.u32 %v353, 23
        %v355 = vor.u32 4788187, %v354
        %v356 = vand.u32 2147483647, %v355
        %v358 = vcvt.s32.f32 %v351
        %v359 = vmul.f32 %v358, %v356
        %v360 = vxor.u32 %v359, 2147483648
        %v361 = vsel %vm278, %v360, %v359
        %v362 = vsub.s32 4, %v338
        %v363 = vsel %vm278, %v362, %v338
        %v364 = vsel %vm277, %v170, %v361
        %v365 = vsel %vm277, 0, %v363
        %v366 = vcosq.f32.pop %v364
        %v367 = vsinq.f32.pop %v364
        %vm368 = vweird.f32 %v170
        %v369 = vadd.s32 %v365, 3
        %v370 = vand.u32 %v369, 3
        %vm371 = vcmp.lt.s32.totalorder %v370, 2
        %vm372 = vcmp.eq.s32.totalorder %v370, 0
        %v373 = vxor.u32 %v367, 2147483648
        %v374 = vsel %vm372, %v366, %v373
        %vm375 = vcmp.eq.s32.totalorder %v370, 2
        %v376 = vxor.u32 %v366, 2147483648
        %v377 = vsel %vm375, %v376, %v367
        %v378 = vsel %vm371, %v374, %v377
        %v379 = vsel %vm368, nan, %v378
        %381 = vrot.lane.b32.xlu0 %v379, 16
        %v382 = vpop.permute.xlu0 %381
        %vm384 = vcmask 261248
        %385 = vst.msk [vmem:[%s134] sm:$0xff] %vm384, %v382
        %s386 = sand.u32 %s71, 1
        %s387 = scalar_lea.sflag [#allocation3], %s386
        %s388 = sand.u32 %s71, 1
        %s389 = smul.addr %s388, 8
        %s390 = scalar_lea.vmem [#allocation2], %s389
        // Predicated region
        $region29: #{positional_embedding_3d.1} parent=27 // pred_check
          %p391 = pneg %p81
        $region30: #{positional_embedding_3d.1} parent=27 // pred_check_branch
          %393 = sbr.rel (%p391) target = $region32
        $region31: #{positional_embedding_3d.1} parent=27 // pred_region
          %s395 = ssub.s32 128, 128
          %396 = vsyncadd %s387, %s395
          %s397 = smul.addr %s16, 128
          %s398 = scalar_lea.hbm %s2, %s397
          %s400 = sshll.u32 %s390, 4
          %s401 = int_to_ptr.vmem [resolvable:$true] %s400
          %403 = dma.vmem_to_hbm [thread:$0]  %s401, 128, %s398, %s387
        $region32: #{positional_embedding_3d.1} parent=27 // pred_fallthru
          _
      $region28: #{positional_embedding_3d.1} parent=5 // pred_fallthru
        _
      %p404 = scmp.le.s32.totalorder 2, %s11
      // Predicated region
      $region33: #{positional_embedding_3d.1} parent=5 // pred_check
        %p405 = pneg %p404
      $region34: #{positional_embedding_3d.1} parent=5 // pred_check_branch
        %407 = sbr.rel (%p405) target = $region36
      $region35: #{positional_embedding_3d.1} parent=5 // pred_region
        %s408 = ssub.s32 %s11, 2
        // Predicated region
        $region37: #{positional_embedding_3d.1} parent=35 // pred_check
          %p409 = pneg %p87
        $region38: #{positional_embedding_3d.1} parent=35 // pred_check_branch
          %411 = sbr.rel (%p409) target = $region40
        $region39: #{positional_embedding_3d.1} parent=35 // pred_region
          %s412 = sand.u32 %s72, 1
          %s413 = scalar_lea.sflag [#allocation3], %s412
          %s414 = sand.u32 %s72, 1
          %s415 = smul.addr %s414, 8
          %s416 = scalar_lea.vmem [#allocation2], %s415
          %417 = dma.done %s413, 128
        $region40: #{positional_embedding_3d.1} parent=35 // pred_fallthru
          _
      $region36: #{positional_embedding_3d.1} parent=5 // pred_fallthru
        _
    $region6: #{positional_embedding_3d.1} parent=1 // loop_footer
      %s15 = sadd.s32 1, %s11
    $region7: #{positional_embedding_3d.1} parent=1 // loop_footer_branch
      %10 = sbr.rel target = $region3
    $region8: #{positional_embedding_3d.1} parent=1 // loop_exit
      _
    %418 = vsyncpa [#allocation3], 1
    %s419 = scalar_lea.sflag [#allocation3], 1
    %420 = vsyncpa %s419, 1

</llo_original>
